<compile_context>
chip_gen: v6e
topology: v6e:2x2x1
jax: 0.10.0
libtpu: 0.0.40
codegen_flags: <defaults>
</compile_context>

<pallas_src>
from functools import partial

import jax
import jax.numpy as jnp
from jax.experimental import pallas as pl
from jax.experimental.pallas import tpu as pltpu


def _round_up(x, m):
    return (x + m - 1) // m * m


def _pick_tile_hw(C, HW, itemsize, budget_bytes=8 * 1024 * 1024):
    """Largest multiple-of-128 spatial tile whose double-buffered block fits
    comfortably inside the default scoped VMEM on all generations
    (16 MiB v5e, 32 MiB v6e/v7x scoped; 64 MiB physical on v7x)."""
    per_lane_bytes = 2 * C * itemsize  # 2x for BlockSpec double-buffering
    max_tile = max(128, (budget_bytes // per_lane_bytes) // 128 * 128)
    return min(_round_up(HW, 128), max_tile)


def _pool_kernel(x_ref, max_ref, sum_ref, max_acc, sum_acc,
                 *, hw, tile_hw, mask_tail):
    # x_ref:   (C, TILE_HW)  one (batch, spatial-tile) slab (batch squeezed)
    # max_ref: (1, C, 1)     per-batch spatial max   (written at last k)
    # sum_ref: (1, C, 1)     per-batch spatial sum   (written at last k)
    # *_acc:   (C, 1) f32    running accumulators in VMEM scratch
    k = pl.program_id(1)

    @pl.when(k == 0)
    def _init():
        max_acc[...] = jnp.full_like(max_acc, -jnp.inf)
        sum_acc[...] = jnp.zeros_like(sum_acc)

    x = x_ref[...].astype(jnp.float32)  # (C, TILE_HW)

    if mask_tail:
        pos = k * tile_hw + jax.lax.broadcasted_iota(jnp.int32, x.shape, 1)
        valid = pos < hw
        x_max = jnp.where(valid, x, -jnp.inf)
        x_sum = jnp.where(valid, x, 0.0)
    else:
        x_max, x_sum = x, x

    max_acc[...] = jnp.maximum(max_acc[...],
                               jnp.max(x_max, axis=-1, keepdims=True))
    sum_acc[...] = sum_acc[...] + jnp.sum(x_sum, axis=-1, keepdims=True)

    @pl.when(k == pl.num_programs(1) - 1)
    def _finalize():
        max_ref[...] = max_acc[...][None].astype(max_ref.dtype)
        sum_ref[...] = sum_acc[...][None].astype(sum_ref.dtype)


def channel_attention(x, w1, w2, *, tile_hw=None):
    """x: (B, C, H, W) NCHW.  w1: (mid, C).  w2: (C, mid).  Returns (B, C, 1, 1)."""
    B, C, H, W = x.shape
    HW = H * W
    itemsize = jnp.dtype(x.dtype).itemsize

    if tile_hw is None:
        tile_hw = _pick_tile_hw(C, HW, itemsize)
    n_tiles = pl.cdiv(HW, tile_hw)
    HWp = n_tiles * tile_hw

    x_flat = x.reshape(B, C, HW)
    if HWp != HW:
        # Zero-pad the spatial axis; padded positions are masked in-kernel.
        x_flat = jnp.pad(x_flat, ((0, 0), (0, 0), (0, HWp - HW)))

    kernel = partial(_pool_kernel, hw=HW, tile_hw=tile_hw,
                     mask_tail=(HWp != HW))

    max_p, sum_p = pl.pallas_call(
        kernel,
        out_shape=(
            jax.ShapeDtypeStruct((B, C, 1), jnp.float32),
            jax.ShapeDtypeStruct((B, C, 1), jnp.float32),
        ),
        grid_spec=pltpu.PrefetchScalarGridSpec(
            num_scalar_prefetch=0,
            grid=(B, n_tiles),
            in_specs=[
                pl.BlockSpec((pl.Squeezed(), C, tile_hw),
                             lambda b, k: (b, 0, k)),
            ],
            out_specs=[
                pl.BlockSpec((1, C, 1), lambda b, k: (b, 0, 0)),
                pl.BlockSpec((1, C, 1), lambda b, k: (b, 0, 0)),
            ],
            scratch_shapes=[
                pltpu.VMEM((C, 1), jnp.float32),
                pltpu.VMEM((C, 1), jnp.float32),
            ],
        ),
        compiler_params=pltpu.CompilerParams(
            dimension_semantics=("parallel", "arbitrary")),
    )(x_flat)

    max_p = max_p[..., 0]                    # (B, C) f32
    avg_p = sum_p[..., 0] / jnp.float32(HW)  # (B, C) f32, true H*W divisor

    # Shared SE MLP + sigmoid hoisted to plain JAX (negligible flops, bad MXU
    # shape inside the kernel); kept in f32, cast back to input dtype at end.
    w1f = w1.astype(jnp.float32)
    w2f = w2.astype(jnp.float32)

    def se(v):
        return jnp.maximum(v @ w1f.T, 0.0) @ w2f.T

    out = jax.nn.sigmoid(se(max_p) + se(avg_p)).astype(x.dtype)
    return out.reshape(B, C, 1, 1)


def reference(x, w1, w2):
    # Pure-JAX reference of the PyTorch forward.
    max_p = jnp.max(x, axis=(2, 3))   # (B, C)
    avg_p = jnp.mean(x, axis=(2, 3))  # (B, C)

    def se(v):
        return jnp.maximum(v @ w1.T, 0.0) @ w2.T

    out = jax.nn.sigmoid(se(max_p) + se(avg_p))
    return out.reshape(*out.shape, 1, 1)


if __name__ == "__main__":
    key = jax.random.PRNGKey(0)

    # --- main case: matches the PyTorch module defaults --------------------
    B, C, H, W = 2, 32, 16, 16
    reduction = 16
    mid = C // reduction

    kx, k1, k2, kx2, k3, k4 = jax.random.split(key, 6)
    x = jax.random.normal(kx, (B, C, H, W), dtype=jnp.float32)
    w1 = jax.random.normal(k1, (mid, C), dtype=jnp.float32) * (2.0 / C) ** 0.5
    w2 = jax.random.normal(k2, (C, mid), dtype=jnp.float32) * (2.0 / mid) ** 0.5

    out = jax.block_until_ready(channel_attention(x, w1, w2))
    ref = reference(x, w1, w2)
    assert out.shape == (B, C, 1, 1)
    assert jnp.allclose(out, ref, atol=1e-5, rtol=1e-5)

    # --- ragged / multi-tile case: exercises padding + masking path --------
    B2, C2, H2, W2 = 2, 16, 20, 20        # HW = 400, not a multiple of 128
    mid2 = C2 // reduction
    x2 = jax.random.normal(kx2, (B2, C2, H2, W2), dtype=jnp.float32)
    w1b = jax.random.normal(k3, (mid2, C2), dtype=jnp.float32) * (2.0 / C2) ** 0.5
    w2b = jax.random.normal(k4, (C2, mid2), dtype=jnp.float32) * (2.0 / mid2) ** 0.5

    out2 = jax.block_until_ready(
        channel_attention(x2, w1b, w2b, tile_hw=128))  # forces 4 spatial tiles
    ref2 = reference(x2, w1b, w2b)
    assert out2.shape == (B2, C2, 1, 1)
    assert jnp.allclose(out2, ref2, atol=1e-5, rtol=1e-5)

    print("KERNEL_OK")
</pallas_src>

<mosaic_0001>
module attributes {stable_mosaic.version = 11 : i64} {
  func.func @_pool_kernel(%arg0: i32, %arg1: i32, %arg2: memref<1x32x256xf32, #tpu.memory_space<vmem>>, %arg3: memref<1x32x1xf32, #tpu.memory_space<vmem>>, %arg4: memref<1x32x1xf32, #tpu.memory_space<vmem>>, %arg5: memref<32x1xf32, #tpu.memory_space<vmem>>, %arg6: memref<32x1xf32, #tpu.memory_space<vmem>>) attributes {dimension_semantics = [#tpu.dimension_semantics<parallel>, #tpu.dimension_semantics<arbitrary>], iteration_bounds = array<i64: 2, 1>, scalar_prefetch = 0 : i64, scratch_operands = 2 : i64, tpu.core_type = #tpu.core_type<tc>, window_params = [{transform_indices = @transform_0, window_bounds = array<i64: 1, 32, 256>}, {transform_indices = @transform_1, window_bounds = array<i64: 1, 32, 1>}, {transform_indices = @transform_2, window_bounds = array<i64: 1, 32, 1>}]} {
    %c0_i32 = arith.constant 0 : i32
    %0 = arith.cmpi eq, %arg1, %c0_i32 : i32
    %1 = arith.extui %0 : i1 to i32
    %c0_i32_0 = arith.constant 0 : i32
    %2 = arith.cmpi ne, %1, %c0_i32_0 : i32
    scf.if %2 {
      %cst_14 = arith.constant 0xFF800000 : f32
      %18 = vector.broadcast %cst_14 : f32 to vector<32x1xf32>
      %c0_15 = arith.constant 0 : index
      %c0_16 = arith.constant 0 : index
      %19 = vector.load %arg5[%c0_15, %c0_16] : memref<32x1xf32, #tpu.memory_space<vmem>>, vector<32x1xf32>
      tpu.vector_store %arg5[%c0_15, %c0_16], %18 {strides = array<i32>} : memref<32x1xf32, #tpu.memory_space<vmem>>, vector<32x1xf32>,
      %cst_17 = arith.constant 0.000000e+00 : f32
      %20 = vector.broadcast %cst_17 : f32 to vector<32x1xf32>
      %c0_18 = arith.constant 0 : index
      %c0_19 = arith.constant 0 : index
      %21 = vector.load %arg6[%c0_18, %c0_19] : memref<32x1xf32, #tpu.memory_space<vmem>>, vector<32x1xf32>
      tpu.vector_store %arg6[%c0_18, %c0_19], %20 {strides = array<i32>} : memref<32x1xf32, #tpu.memory_space<vmem>>, vector<32x1xf32>,
    } else {
    }
    %c0 = arith.constant 0 : index
    %c0_1 = arith.constant 0 : index
    %c0_2 = arith.constant 0 : index
    %3 = vector.load %arg2[%c0, %c0_1, %c0_2] : memref<1x32x256xf32, #tpu.memory_space<vmem>>, vector<1x32x256xf32>
    %4 = vector.shape_cast %3 : vector<1x32x256xf32> to vector<32x256xf32>
    %c0_3 = arith.constant 0 : index
    %c0_4 = arith.constant 0 : index
    %5 = vector.load %arg5[%c0_3, %c0_4] : memref<32x1xf32, #tpu.memory_space<vmem>>, vector<32x1xf32>
    %cst = arith.constant dense<0xFF800000> : vector<32xf32>
    %6 = vector.multi_reduction <maximumf>, %4, %cst [1] : vector<32x256xf32> to vector<32xf32>
    %7 = vector.shape_cast %6 : vector<32xf32> to vector<32x1xf32>
    %8 = arith.maximumf %5, %7 : vector<32x1xf32>
    %c0_5 = arith.constant 0 : index
    %c0_6 = arith.constant 0 : index
    %9 = vector.load %arg5[%c0_5, %c0_6] : memref<32x1xf32, #tpu.memory_space<vmem>>, vector<32x1xf32>
    tpu.vector_store %arg5[%c0_5, %c0_6], %8 {strides = array<i32>} : memref<32x1xf32, #tpu.memory_space<vmem>>, vector<32x1xf32>,
    %c0_7 = arith.constant 0 : index
    %c0_8 = arith.constant 0 : index
    %10 = vector.load %arg6[%c0_7, %c0_8] : memref<32x1xf32, #tpu.memory_space<vmem>>, vector<32x1xf32>
    %cst_9 = arith.constant dense<0.000000e+00> : vector<32xf32>
    %11 = vector.multi_reduction <add>, %4, %cst_9 [1] : vector<32x256xf32> to vector<32xf32>
    %12 = vector.shape_cast %11 : vector<32xf32> to vector<32x1xf32>
    %13 = arith.addf %10, %12 : vector<32x1xf32>
    %c0_10 = arith.constant 0 : index
    %c0_11 = arith.constant 0 : index
    %14 = vector.load %arg6[%c0_10, %c0_11] : memref<32x1xf32, #tpu.memory_space<vmem>>, vector<32x1xf32>
    tpu.vector_store %arg6[%c0_10, %c0_11], %13 {strides = array<i32>} : memref<32x1xf32, #tpu.memory_space<vmem>>, vector<32x1xf32>,
    %c0_i32_12 = arith.constant 0 : i32
    %15 = arith.cmpi eq, %arg1, %c0_i32_12 : i32
    %16 = arith.extui %15 : i1 to i32
    %c0_i32_13 = arith.constant 0 : i32
    %17 = arith.cmpi ne, %16, %c0_i32_13 : i32
    scf.if %17 {
      %c0_14 = arith.constant 0 : index
      %c0_15 = arith.constant 0 : index
      %18 = vector.load %arg5[%c0_14, %c0_15] : memref<32x1xf32, #tpu.memory_space<vmem>>, vector<32x1xf32>
      %19 = vector.shape_cast %18 : vector<32x1xf32> to vector<1x32x1xf32>
      %c0_16 = arith.constant 0 : index
      %c0_17 = arith.constant 0 : index
      %c0_18 = arith.constant 0 : index
      %20 = vector.load %arg3[%c0_16, %c0_17, %c0_18] : memref<1x32x1xf32, #tpu.memory_space<vmem>>, vector<1x32x1xf32>
      tpu.vector_store %arg3[%c0_16, %c0_17, %c0_18], %19 {strides = array<i32>} : memref<1x32x1xf32, #tpu.memory_space<vmem>>, vector<1x32x1xf32>,
      %c0_19 = arith.constant 0 : index
      %c0_20 = arith.constant 0 : index
      %21 = vector.load %arg6[%c0_19, %c0_20] : memref<32x1xf32, #tpu.memory_space<vmem>>, vector<32x1xf32>
      %22 = vector.shape_cast %21 : vector<32x1xf32> to vector<1x32x1xf32>
      %c0_21 = arith.constant 0 : index
      %c0_22 = arith.constant 0 : index
      %c0_23 = arith.constant 0 : index
      %23 = vector.load %arg4[%c0_21, %c0_22, %c0_23] : memref<1x32x1xf32, #tpu.memory_space<vmem>>, vector<1x32x1xf32>
      tpu.vector_store %arg4[%c0_21, %c0_22, %c0_23], %22 {strides = array<i32>} : memref<1x32x1xf32, #tpu.memory_space<vmem>>, vector<1x32x1xf32>,
    } else {
    }
    return
  }
  func.func @transform_0(%arg0: i32, %arg1: i32) -> (i32, i32, i32) {
    %c0_i32 = arith.constant 0 : i32
    %c0_i32_0 = arith.constant 0 : i32
    return %arg0, %c0_i32, %arg1 : i32, i32, i32
  }
  func.func @transform_1(%arg0: i32, %arg1: i32) -> (i32, i32, i32) {
    %c0_i32 = arith.constant 0 : i32
    %c0_i32_0 = arith.constant 0 : i32
    %c0_i32_1 = arith.constant 0 : i32
    return %arg0, %c0_i32, %c0_i32_0 : i32, i32, i32
  }
  func.func @transform_2(%arg0: i32, %arg1: i32) -> (i32, i32, i32) {
    %c0_i32 = arith.constant 0 : i32
    %c0_i32_0 = arith.constant 0 : i32
    %c0_i32_1 = arith.constant 0 : i32
    return %arg0, %c0_i32, %c0_i32_0 : i32, i32, i32
  }
}

</mosaic_0001>

<llo_original>
// kernel: tpu_custom_call.1
$region0: #{tpu_custom_call.1}
  #allocation0 [shape = 'u32[]', space=smem, size = 0x4, offset = 0x4, fixed_abs, tag = 'smem constant byte address 0x4 - core index']
  #allocation1 [shape = 'u32[144,128]{1,0:T(1,128)}', space=vmem, size = 0x12000, scoped, tag = 'internal scratch']
  #allocation2 [shape = 'f32[32,1]{1,0:T(8,128)}', space=vmem, size = 0x4000, scoped, tag = 'scratch operand']
  #allocation3 [shape = 'f32[32,1]{1,0:T(8,128)}', space=vmem, size = 0x4000, scoped, tag = 'scratch operand']
  %s0 = inlined_call_operand.hbm [shape: f32[2,32,256], index: 0, kind: input, shape index: {}]
  %s1 = inlined_call_operand.vmem [shape: f32[2,32,1], index: 1, kind: output, shape index: {0}]
  %s2 = inlined_call_operand.vmem [shape: f32[2,32,1], index: 2, kind: output, shape index: {1}]
  %3 = xla_tuple %s1, %s2
  %s4 = sld [smem:[#allocation0]]
  $region57: #{tpu_custom_call.1} parent=0
    _
  %s6 = ssub.s32 1, %s4
  %s7 = scalar_select 0, %s6, %s4
  $region1: #{tpu_custom_call.1} parent=0
    #allocation4 [shape = 'u8[65536]{0}', space=vmem, size = 0x10000, scoped, tag = 'input window, operand 0']
    #allocation5 [shape = 's32[2]{0}', space=sflag, size = 0x8, scoped, tag = 'scoped memory for tpu_custom_call.1']
    %8 = vsyncpa [#allocation5], 0
    %s9 = scalar_lea.sflag [#allocation5], 1
    %10 = vsyncpa %s9, 0
    loop: start=0, step=1, limit=4
    $region2: #{tpu_custom_call.1} parent=1 // loop_pre_header
      _
    $region3: #{tpu_custom_call.1} parent=1 // loop_header
      %s12 = sphi 0, %s16
      %p13 = scmp.ge.s32.totalorder %s12, 4
      %s19 = sphi 0, %s31
      %s20 = sphi 0, %s27
      %s21 = sphi 0, %s19
      %s22 = sphi 0, %s20
      %s23 = sphi 0, %s21
      %s24 = sphi 0, %s22
      %s36 = sphi 0, %s38
      %s39 = sphi 0, %s36
      %s40 = sphi 0, %s39
      %s56 = sphi 0, %s40
      %s62 = sphi 0, %s64
      %s65 = sphi 0, %s62
      %s66 = sphi 0, %s65
      %s82 = sphi 0, %s66
      %s88 = sphi 0, %s90
      %s91 = sphi 0, %s88
      %s92 = sphi 0, %s91
      %s108 = sphi 0, %s92
    $region4: #{tpu_custom_call.1} parent=1 // loop_header_branch
      %15 = sbr.rel (%p13) target = $region8
    $region5: #{tpu_custom_call.1} parent=1 // loop_body
      %s17 = ssub.s32 %s12, 1
      %s18 = ssub.s32 %s12, 2
      %s25 = sadd.s32 1, %s20
      %p26 = scmp.ge.s32.totalorder %s25, 1
      %s27 = scalar_select %p26, 0, %s25
      %s28 = sadd.s32 1, %s19
      %s29 = scalar_select %p26, %s28, %s19
      %p30 = scmp.ge.s32.totalorder %s29, 2
      %s31 = scalar_select %p30, 0, %s29
      %s32 = ssub.s32 %s19, %s31
      %s33 = ssub.s32 %s20, %s27
      %s34 = sor.u32 %s32, %s33
      %p35 = scmp.eq.s32.totalorder %s34, 0
      %s37 = sadd.s32 %s36, 1
      %s38 = scalar_select %p35, %s36, %s37
      %p41 = pneg %p35
      %p42 = scmp.eq.s32.totalorder %s12, 1
      %p43 = por %p41, %p42
      %p44 = scmp.ne.s32.totalorder %s36, %s39
      %p45 = scmp.eq.s32.totalorder %s12, 0
      %p46 = por %p44, %p45
      %p47 = scmp.ne.s32.totalorder %s36, %s39
      %p48 = scmp.eq.s32.totalorder %s17, 1
      %p49 = por %p47, %p48
      %p50 = scmp.ne.s32.totalorder %s39, %s40
      %p51 = scmp.eq.s32.totalorder %s17, 0
      %p52 = por %p50, %p51
      %p53 = scmp.ne.s32.totalorder %s39, %s40
      %p54 = scmp.eq.s32.totalorder %s18, 1
      %p55 = por %p53, %p54
      %p57 = scmp.ne.s32.totalorder %s40, %s56
      %p58 = scmp.eq.s32.totalorder %s18, 0
      %p59 = por %p57, %p58
      %s60 = ssub.s32 %s19, %s31
      %p61 = scmp.eq.s32.totalorder %s60, 0
      %s63 = sadd.s32 %s62, 1
      %s64 = scalar_select %p61, %s62, %s63
      %p67 = pneg %p61
      %p68 = scmp.eq.s32.totalorder %s12, 1
      %p69 = por %p67, %p68
      %p70 = scmp.ne.s32.totalorder %s62, %s65
      %p71 = scmp.eq.s32.totalorder %s12, 0
      %p72 = por %p70, %p71
      %p73 = scmp.ne.s32.totalorder %s62, %s65
      %p74 = scmp.eq.s32.totalorder %s17, 1
      %p75 = por %p73, %p74
      %p76 = scmp.ne.s32.totalorder %s65, %s66
      %p77 = scmp.eq.s32.totalorder %s17, 0
      %p78 = por %p76, %p77
      %p79 = scmp.ne.s32.totalorder %s65, %s66
      %p80 = scmp.eq.s32.totalorder %s18, 1
      %p81 = por %p79, %p80
      %p83 = scmp.ne.s32.totalorder %s66, %s82
      %p84 = scmp.eq.s32.totalorder %s18, 0
      %p85 = por %p83, %p84
      %s86 = ssub.s32 %s19, %s31
      %p87 = scmp.eq.s32.totalorder %s86, 0
      %s89 = sadd.s32 %s88, 1
      %s90 = scalar_select %p87, %s88, %s89
      %p93 = pneg %p87
      %p94 = scmp.eq.s32.totalorder %s12, 1
      %p95 = por %p93, %p94
      %p96 = scmp.ne.s32.totalorder %s88, %s91
      %p97 = scmp.eq.s32.totalorder %s12, 0
      %p98 = por %p96, %p97
      %p99 = scmp.ne.s32.totalorder %s88, %s91
      %p100 = scmp.eq.s32.totalorder %s17, 1
      %p101 = por %p99, %p100
      %p102 = scmp.ne.s32.totalorder %s91, %s92
      %p103 = scmp.eq.s32.totalorder %s17, 0
      %p104 = por %p102, %p103
      %p105 = scmp.ne.s32.totalorder %s91, %s92
      %p106 = scmp.eq.s32.totalorder %s18, 1
      %p107 = por %p105, %p106
      %p109 = scmp.ne.s32.totalorder %s92, %s108
      %p110 = scmp.eq.s32.totalorder %s18, 0
      %p111 = por %p109, %p110
      %p112 = scmp.le.s32.totalorder 1, %s12
      %p113 = scmp.lt.s32.totalorder %s12, 3
      %p114 = pnand %p112, %p113
      %p115 = pneg %p114
      // Predicated region
      $region9: #{tpu_custom_call.1} parent=5 // pred_check
        _
      $region10: #{tpu_custom_call.1} parent=5 // pred_check_branch
        %117 = sbr.rel (%p114) target = $region12
      $region11: #{tpu_custom_call.1} parent=5 // pred_region
        %s118 = ssub.s32 %s12, 1
      $region12: #{tpu_custom_call.1} parent=5 // pred_fallthru
        _
      %p119 = scmp.lt.s32.totalorder %s12, 2
      // Predicated region
      $region13: #{tpu_custom_call.1} parent=5 // pred_check
        %p120 = pneg %p119
      $region14: #{tpu_custom_call.1} parent=5 // pred_check_branch
        %122 = sbr.rel (%p120) target = $region16
      $region15: #{tpu_custom_call.1} parent=5 // pred_region
        // Predicated region
        $region17: #{tpu_custom_call.1} parent=15 // pred_check
          %p123 = pneg %p46
        $region18: #{tpu_custom_call.1} parent=15 // pred_check_branch
          %125 = sbr.rel (%p123) target = $region20
        $region19: #{tpu_custom_call.1} parent=15 // pred_region
          %s126 = sand.u32 %s36, 1
          %s127 = scalar_lea.sflag [#allocation5], %s126
          %s128 = sand.u32 %s36, 1
          %s129 = smul.addr %s128, 64
          %s130 = scalar_lea.vmem [#allocation4], %s129
          %s131 = smul.u32 2, %s20
          %s133 = ssub.s32 1024, 1024
          %134 = vsyncadd %s127, %s133
          %s135 = smul.addr %s19, 8
          %s136 = sadd.s32 %s131, %s135
          %s137 = smul.addr %s136, 128
          %s138 = scalar_lea.hbm %s0, %s137
          %s139 = sshll.u32 %s130, 4
          %s140 = int_to_ptr.vmem [resolvable:$true] %s139
          %145 = dma.hbm_to_vmem [thread:$0]  %s138, 1024, %s140, %s127, 256, 256, 16
        $region20: #{tpu_custom_call.1} parent=15 // pred_fallthru
          _
      $region16: #{tpu_custom_call.1} parent=5 // pred_fallthru
        _
      %p146 = scmp.le.s32.totalorder 1, %s12
      %p147 = scmp.lt.s32.totalorder %s12, 3
      %p148 = pnand %p146, %p147
      %p149 = pneg %p148
      // Predicated region
      $region21: #{tpu_custom_call.1} parent=5 // pred_check
        _
      $region22: #{tpu_custom_call.1} parent=5 // pred_check_branch
        %151 = sbr.rel (%p148) target = $region24
      $region23: #{tpu_custom_call.1} parent=5 // pred_region
        %s152 = ssub.s32 %s12, 1
        %s153 = sand.u32 %s39, 1
        %s154 = scalar_lea.sflag [#allocation5], %s153
        %s155 = sand.u32 %s39, 1
        %s156 = smul.addr %s155, 64
        %s157 = scalar_lea.vmem [#allocation4], %s156
        // Predicated region
        $region25: #{tpu_custom_call.1} parent=23 // pred_check
          %p158 = pneg %p52
        $region26: #{tpu_custom_call.1} parent=23 // pred_check_branch
          %160 = sbr.rel (%p158) target = $region28
        $region27: #{tpu_custom_call.1} parent=23 // pred_region
          %161 = dma.done %s154, 1024
        $region28: #{tpu_custom_call.1} parent=23 // pred_fallthru
          _
        %s162 = sand.u32 %s39, 1
        %s163 = scalar_lea.sflag [#allocation5], %s162
        %s164 = sand.u32 %s39, 1
        %s165 = smul.addr %s164, 64
        %s166 = scalar_lea.vmem [#allocation4], %s165
        %p167 = pneg %p52
        %p168 = pneg %p49
        %p169 = pneg %p78
        %p170 = pneg %p75
        %p171 = scmp.lt.s32.totalorder %s21, 1
        %s172 = scalar_select %p171, %s21, 1
        %s173 = smul.addr %s172, 4
        %s174 = smul.addr %s173, 8
        %s175 = scalar_lea.vmem %s1, %s174
        %p176 = pneg %p104
        %p177 = pneg %p101
        %p178 = scmp.lt.s32.totalorder %s21, 1
        %s179 = scalar_select %p178, %s21, 1
        %s180 = smul.addr %s179, 4
        %s181 = smul.addr %s180, 8
        %s182 = scalar_lea.vmem %s2, %s181
        %s183 = smul.u32 2, %s22
        %p184 = scmp.lt.s32.totalorder %s21, 1
        %s185 = scalar_select %p184, %s21, 1
        %s186 = smul.addr %s185, 4
        %s187 = smul.addr %s186, 8
        %s188 = scalar_lea.vmem %s1, %s187
        %p189 = scmp.lt.s32.totalorder %s21, 1
        %s190 = scalar_select %p189, %s21, 1
        %s191 = smul.addr %s190, 4
        %s192 = smul.addr %s191, 8
        %s193 = scalar_lea.vmem %s2, %s192
        %p194 = scmp.eq.s32.totalorder %s22, 0
        // Predicated region
        $region29: #{tpu_custom_call.1} parent=23 // pred_check
          %p195 = pneg %p194
        $region30: #{tpu_custom_call.1} parent=23 // pred_check_branch
          %197 = sbr.rel (%p195) target = $region32
        $region31: #{tpu_custom_call.1} parent=23 // pred_region
          %vm198 = vcmask 7168
          %199 = vst.msk [vmem:[#allocation2] sm:$0xff] %vm198, -inf
          %200 = vst.msk [vmem:[#allocation2 + $0x8] sm:$0xff] %vm198, -inf
          %201 = vst.msk [vmem:[#allocation2 + $0x10] sm:$0xff] %vm198, -inf
          %202 = vst.msk [vmem:[#allocation2 + $0x18] sm:$0xff] %vm198, -inf
          %203 = vst.msk [vmem:[#allocation3] sm:$0xff] %vm198, 0.0
          %204 = vst.msk [vmem:[#allocation3 + $0x8] sm:$0xff] %vm198, 0.0
          %205 = vst.msk [vmem:[#allocation3 + $0x10] sm:$0xff] %vm198, 0.0
          %206 = vst.msk [vmem:[#allocation3 + $0x18] sm:$0xff] %vm198, 0.0
        $region32: #{tpu_custom_call.1} parent=23 // pred_fallthru
          _
        %v207 = vld [vmem:[%s157] sm:$0xff]
        %v208 = vld [vmem:[%s157 + $0x8] sm:$0xff]
        %v209 = vld [vmem:[%s157 + $0x10] sm:$0xff]
        %v210 = vld [vmem:[%s157 + $0x18] sm:$0xff]
        %v211 = vld [vmem:[%s157 + $0x20] sm:$0xff]
        %v212 = vld [vmem:[%s157 + $0x28] sm:$0xff]
        %v213 = vld [vmem:[%s157 + $0x30] sm:$0xff]
        %v214 = vld [vmem:[%s157 + $0x38] sm:$0xff]
        %v215 = vld [vmem:[#allocation2] sm:$0xff]
        %v216 = vld [vmem:[#allocation2 + $0x8] sm:$0xff]
        %v217 = vld [vmem:[#allocation2 + $0x10] sm:$0xff]
        %v218 = vld [vmem:[#allocation2 + $0x18] sm:$0xff]
        %v219 = vmax.f32 %v207, %v208
        %220 = vmax.xlane.f32.xlu0 %v219
        %v221 = vpop.xlane.xlu0 %220
        %v222 = vmax.f32 %v209, %v210
        %223 = vmax.xlane.f32.xlu0 %v222
        %v224 = vpop.xlane.xlu0 %223
        %v225 = vmax.f32 %v211, %v212
        %226 = vmax.xlane.f32.xlu0 %v225
        %v227 = vpop.xlane.xlu0 %226
        %v228 = vmax.f32 %v213, %v214
        %229 = vmax.xlane.f32.xlu0 %v228
        %v230 = vpop.xlane.xlu0 %229
        %v231 = vmax.f32 %v215, %v221
        %v232 = vmax.f32 %v216, %v224
        %v233 = vmax.f32 %v217, %v227
        %v234 = vmax.f32 %v218, %v230
        %vm235 = vcmask 7168
        %236 = vst.msk [vmem:[#allocation2] sm:$0xff] %vm235, %v231
        %237 = vst.msk [vmem:[#allocation2 + $0x8] sm:$0xff] %vm235, %v232
        %238 = vst.msk [vmem:[#allocation2 + $0x10] sm:$0xff] %vm235, %v233
        %239 = vst.msk [vmem:[#allocation2 + $0x18] sm:$0xff] %vm235, %v234
        %v240 = vld [vmem:[#allocation3] sm:$0xff]
        %v241 = vld [vmem:[#allocation3 + $0x8] sm:$0xff]
        %v242 = vld [vmem:[#allocation3 + $0x10] sm:$0xff]
        %v243 = vld [vmem:[#allocation3 + $0x18] sm:$0xff]
        %v244 = vadd.f32 %v207, %v208
        %245 = vadd.xlane.f32.xlu0 %v244
        %v246 = vpop.xlane.xlu0 %245
        %v247 = vadd.f32 %v209, %v210
        %248 = vadd.xlane.f32.xlu0 %v247
        %v249 = vpop.xlane.xlu0 %248
        %v250 = vadd.f32 %v211, %v212
        %251 = vadd.xlane.f32.xlu0 %v250
        %v252 = vpop.xlane.xlu0 %251
        %v253 = vadd.f32 %v213, %v214
        %254 = vadd.xlane.f32.xlu0 %v253
        %v255 = vpop.xlane.xlu0 %254
        %v256 = vadd.f32 %v240, %v246
        %v257 = vadd.f32 %v241, %v249
        %v258 = vadd.f32 %v242, %v252
        %v259 = vadd.f32 %v243, %v255
        %260 = vst.msk [vmem:[#allocation3] sm:$0xff] %vm235, %v256
        %261 = vst.msk [vmem:[#allocation3 + $0x8] sm:$0xff] %vm235, %v257
        %262 = vst.msk [vmem:[#allocation3 + $0x10] sm:$0xff] %vm235, %v258
        %263 = vst.msk [vmem:[#allocation3 + $0x18] sm:$0xff] %vm235, %v259
        // Predicated region
        $region33: #{tpu_custom_call.1} parent=23 // pred_check
          %p264 = pneg %p194
        $region34: #{tpu_custom_call.1} parent=23 // pred_check_branch
          %266 = sbr.rel (%p264) target = $region36
        $region35: #{tpu_custom_call.1} parent=23 // pred_region
          %v267 = vld [vmem:[#allocation2] sm:$0xff]
          %v268 = vld [vmem:[#allocation2 + $0x8] sm:$0xff]
          %v269 = vld [vmem:[#allocation2 + $0x10] sm:$0xff]
          %v270 = vld [vmem:[#allocation2 + $0x18] sm:$0xff]
          %271 = vst.msk [vmem:[%s188] sm:$0xff] %vm235, %v267
          %272 = vst.msk [vmem:[%s188 + $0x8] sm:$0xff] %vm235, %v268
          %273 = vst.msk [vmem:[%s188 + $0x10] sm:$0xff] %vm235, %v269
          %274 = vst.msk [vmem:[%s188 + $0x18] sm:$0xff] %vm235, %v270
          %v275 = vld [vmem:[#allocation3] sm:$0xff]
          %v276 = vld [vmem:[#allocation3 + $0x8] sm:$0xff]
          %v277 = vld [vmem:[#allocation3 + $0x10] sm:$0xff]
          %v278 = vld [vmem:[#allocation3 + $0x18] sm:$0xff]
          %279 = vst.msk [vmem:[%s193] sm:$0xff] %vm235, %v275
          %280 = vst.msk [vmem:[%s193 + $0x8] sm:$0xff] %vm235, %v276
          %281 = vst.msk [vmem:[%s193 + $0x10] sm:$0xff] %vm235, %v277
          %282 = vst.msk [vmem:[%s193 + $0x18] sm:$0xff] %vm235, %v278
        $region36: #{tpu_custom_call.1} parent=23 // pred_fallthru
          _
        %p283 = scmp.lt.s32.totalorder %s21, 1
        %s284 = scalar_select %p283, %s21, 1
        %s285 = smul.addr %s284, 4
        %s286 = smul.addr %s285, 8
        %s287 = scalar_lea.vmem %s1, %s286
        %p288 = scmp.lt.s32.totalorder %s21, 1
        %s289 = scalar_select %p288, %s21, 1
        %s290 = smul.addr %s289, 4
        %s291 = smul.addr %s290, 8
        %s292 = scalar_lea.vmem %s2, %s291
        // Predicated region
        $region37: #{tpu_custom_call.1} parent=23 // pred_check
          %p293 = pneg %p75
        $region38: #{tpu_custom_call.1} parent=23 // pred_check_branch
          %295 = sbr.rel (%p293) target = $region40
        $region39: #{tpu_custom_call.1} parent=23 // pred_region
          _
        $region40: #{tpu_custom_call.1} parent=23 // pred_fallthru
          _
        // Predicated region
        $region41: #{tpu_custom_call.1} parent=23 // pred_check
          %p296 = pneg %p101
        $region42: #{tpu_custom_call.1} parent=23 // pred_check_branch
          %298 = sbr.rel (%p296) target = $region44
        $region43: #{tpu_custom_call.1} parent=23 // pred_region
          _
        $region44: #{tpu_custom_call.1} parent=23 // pred_fallthru
          _
      $region24: #{tpu_custom_call.1} parent=5 // pred_fallthru
        _
      %p299 = scmp.le.s32.totalorder 2, %s12
      // Predicated region
      $region45: #{tpu_custom_call.1} parent=5 // pred_check
        %p300 = pneg %p299
      $region46: #{tpu_custom_call.1} parent=5 // pred_check_branch
        %302 = sbr.rel (%p300) target = $region48
      $region47: #{tpu_custom_call.1} parent=5 // pred_region
        %s303 = ssub.s32 %s12, 2
        // Predicated region
        $region49: #{tpu_custom_call.1} parent=47 // pred_check
          %p304 = pneg %p81
        $region50: #{tpu_custom_call.1} parent=47 // pred_check_branch
          %306 = sbr.rel (%p304) target = $region52
        $region51: #{tpu_custom_call.1} parent=47 // pred_region
          %p307 = scmp.lt.s32.totalorder %s23, 1
          %s308 = scalar_select %p307, %s23, 1
          %s309 = smul.addr %s308, 4
          %s310 = smul.addr %s309, 8
          %s311 = scalar_lea.vmem %s1, %s310
        $region52: #{tpu_custom_call.1} parent=47 // pred_fallthru
          _
        // Predicated region
        $region53: #{tpu_custom_call.1} parent=47 // pred_check
          %p312 = pneg %p107
        $region54: #{tpu_custom_call.1} parent=47 // pred_check_branch
          %314 = sbr.rel (%p312) target = $region56
        $region55: #{tpu_custom_call.1} parent=47 // pred_region
          %p315 = scmp.lt.s32.totalorder %s23, 1
          %s316 = scalar_select %p315, %s23, 1
          %s317 = smul.addr %s316, 4
          %s318 = smul.addr %s317, 8
          %s319 = scalar_lea.vmem %s2, %s318
        $region56: #{tpu_custom_call.1} parent=47 // pred_fallthru
          _
      $region48: #{tpu_custom_call.1} parent=5 // pred_fallthru
        _
    $region6: #{tpu_custom_call.1} parent=1 // loop_footer
      %s16 = sadd.s32 1, %s12
    $region7: #{tpu_custom_call.1} parent=1 // loop_footer_branch
      %11 = sbr.rel target = $region3
    $region8: #{tpu_custom_call.1} parent=1 // loop_exit
      _
    %320 = vsyncpa [#allocation5], 1
    %s321 = scalar_lea.sflag [#allocation5], 1
    %322 = vsyncpa %s321, 1

</llo_original>
